<compile_context>
chip_gen: v7x
topology: tpu7x:2x2x1
jax: 0.10.0
libtpu: 0.0.40
codegen_flags: <defaults>
</compile_context>

<pallas_src>
import functools

import jax
import jax.numpy as jnp
from jax import lax
from jax.experimental import pallas as pl
from jax.experimental.pallas import tpu as pltpu


def _hyper_kernel(t_ref, w1_ref, b1_ref, w2_ref, b2_ref, o_ref, *, h_max):
    # t_ref:  (BM, token_dim)        selected-token block (lane = token_dim)
    # w1_ref: (squeeze, token_dim)   PyTorch (out, in) layout
    # b1_ref: (1, squeeze)
    # w2_ref: (oup_p, squeeze)       PyTorch (out, in) layout, oup padded to 128-lane multiple
    # b2_ref: (1, oup_p)
    # o_ref:  (BM, oup_p)            lane-dense output (unmasked stores)
    t = t_ref[...].astype(w1_ref.dtype)
    # Contract last dims of both operands -> no transposes anywhere.
    h = lax.dot_general(t, w1_ref[...], (((1,), (1,)), ((), ())),
                        preferred_element_type=jnp.float32)            # (BM, squeeze) f32
    h = jnp.maximum(h + b1_ref[...].astype(jnp.float32), 0.0)          # ReLU on f32 accumulator
    y = lax.dot_general(h.astype(w2_ref.dtype), w2_ref[...],
                        (((1,), (1,)), ((), ())),
                        preferred_element_type=jnp.float32)            # (BM, oup_p) f32
    y = y + b2_ref[...].astype(jnp.float32)
    # h_sigmoid: relu6(y + 3) * h_max / 6
    o_ref[...] = (jnp.clip(y + 3.0, 0.0, 6.0) * (h_max / 6.0)).astype(o_ref.dtype)


def prepare_hyper_params(w1, b1, w2, b2):
    """One-time param prep (no per-call transposes): pad oup to a 128-lane multiple."""
    squeeze, _ = w1.shape
    oup = w2.shape[0]
    oup_p = ((oup + 127) // 128) * 128
    if oup_p != oup:
        w2 = jnp.pad(w2, ((0, oup_p - oup), (0, 0)))
        b2 = jnp.pad(b2, (0, oup_p - oup))
    return {
        "w1": w1,                       # (squeeze, token_dim)
        "b1": b1.reshape(1, squeeze),   # (1, squeeze)
        "w2": w2,                       # (oup_p, squeeze)
        "b2": b2.reshape(1, oup_p),     # (1, oup_p)
        "oup": oup,
        "oup_p": oup_p,
    }


def _pick_tiling(bs, token_dim, oup_p, itemsize):
    # Small batches: one full-extent block (no (8,128) constraint, single grid step).
    if bs <= 512:
        return bs, (1,)
    # Large batches: fixed sublane-aligned block, cdiv grid (Pallas pads the ragged tail).
    # Budget the double-buffered streamed tiles against a conservative VMEM slice that
    # also fits v7x's smaller (64 MiB physical / 32 MiB default-scoped) VMEM.
    budget = 16 * 1024 * 1024
    per_row = 2 * (token_dim + oup_p) * itemsize          # double-buffered in + out
    bm = int(min(512, max(8, (budget // per_row) // 8 * 8)))
    return bm, (pl.cdiv(bs, bm),)


def hyper_func(x, params, *, sel_token_id=0, h_max=1.0):
    """HyperFunc forward (sel_token_id >= 0 path).

    x : (T, bs, token_dim) tokens-first sequence
    params : output of prepare_hyper_params
    returns (bs, oup, 1, 1)
    """
    # TODO(synk): the sel_token_id == -1 branch (per-token hyper outputs matmul'd with a
    # spatial attention map) is not implemented; only the default token-select path.
    assert sel_token_id >= 0, "attention-broadcast (-1) branch not implemented"
    T, bs, token_dim = x.shape
    w1, b1, w2, b2 = params["w1"], params["b1"], params["w2"], params["b2"]
    oup, oup_p = params["oup"], params["oup_p"]
    squeeze = w1.shape[0]
    out_dtype = x.dtype
    itemsize = jnp.dtype(out_dtype).itemsize

    bm, grid = _pick_tiling(bs, token_dim, oup_p, itemsize)

    cost = pl.CostEstimate(
        flops=2 * bs * token_dim * squeeze + 2 * bs * squeeze * oup_p,
        transcendentals=0,
        bytes_accessed=(bs * (token_dim + oup_p)) * itemsize
        + (w1.size + b1.size + w2.size + b2.size) * jnp.dtype(w1.dtype).itemsize,
    )

    kernel = functools.partial(_hyper_kernel, h_max=float(h_max))
    out = pl.pallas_call(
        kernel,
        out_shape=jax.ShapeDtypeStruct((bs, oup_p), out_dtype),
        grid=grid,
        in_specs=[
            # Token selection fused into the BlockSpec: squeezed T axis, index = sel_token_id.
            pl.BlockSpec((None, bm, token_dim), lambda i: (sel_token_id, i, 0)),
            pl.BlockSpec((squeeze, token_dim), lambda i: (0, 0)),   # W1 (resident)
            pl.BlockSpec((1, squeeze), lambda i: (0, 0)),           # b1
            pl.BlockSpec((oup_p, squeeze), lambda i: (0, 0)),       # W2 (resident, lane-padded rows)
            pl.BlockSpec((1, oup_p), lambda i: (0, 0)),             # b2
        ],
        out_specs=pl.BlockSpec((bm, oup_p), lambda i: (i, 0)),
        compiler_params=pltpu.CompilerParams(
            dimension_semantics=("parallel",)),
        cost_estimate=cost,
    )(x, w1, b1, w2, b2)

    if oup_p != oup:
        out = out[:, :oup]
    return out.reshape(bs, oup, 1, 1)


def ref_forward(x, w1, b1, w2, b2, *, sel_token_id=0, h_max=1.0):
    """Pure-JAX reference matching the PyTorch module (sel_token_id >= 0 path)."""
    t = x[sel_token_id]
    h = jnp.maximum(t @ w1.T + b1, 0.0)
    y = h @ w2.T + b2
    y = jnp.clip(y + 3.0, 0.0, 6.0) * h_max / 6.0
    return y[:, :, None, None]


if __name__ == "__main__":
    T, bs, token_dim = 8, 2, 32
    reduction_ratio = 4
    squeeze = token_dim // reduction_ratio                    # 8
    oup = 64

    key = jax.random.PRNGKey(0)
    k = jax.random.split(key, 5)
    x = jax.random.normal(k[0], (T, bs, token_dim), jnp.float32)
    w1 = jax.random.normal(k[1], (squeeze, token_dim), jnp.float32) * 0.2
    b1 = jax.random.normal(k[2], (squeeze,), jnp.float32) * 0.1
    w2 = jax.random.normal(k[3], (oup, squeeze), jnp.float32) * 0.2
    b2 = jax.random.normal(k[4], (oup,), jnp.float32) * 0.1

    params = prepare_hyper_params(w1, b1, w2, b2)             # one-time layout prep
    out = hyper_func(x, params, sel_token_id=0, h_max=1.0)
    out = jax.block_until_ready(out)

    ref = ref_forward(x, w1, b1, w2, b2)
    assert out.shape == ref.shape, (out.shape, ref.shape)
    assert jnp.allclose(out, ref, atol=1e-5, rtol=1e-5), float(jnp.max(jnp.abs(out - ref)))
    print("KERNEL_OK")
</pallas_src>

<mosaic_0001>
module attributes {stable_mosaic.version = 11 : i64} {
  func.func @_hyper_kernel(%arg0: i32, %arg1: memref<1x2x32xf32, #tpu.memory_space<vmem>>, %arg2: memref<8x32xf32, #tpu.memory_space<vmem>>, %arg3: memref<1x8xf32, #tpu.memory_space<vmem>>, %arg4: memref<128x8xf32, #tpu.memory_space<vmem>>, %arg5: memref<1x128xf32, #tpu.memory_space<vmem>>, %arg6: memref<2x128xf32, #tpu.memory_space<vmem>>) attributes {dimension_semantics = [#tpu.dimension_semantics<parallel>], iteration_bounds = array<i64: 1>, scalar_prefetch = 0 : i64, scratch_operands = 0 : i64, tpu.core_type = #tpu.core_type<tc>, window_params = [{transform_indices = @transform_0, window_bounds = array<i64: 1, 2, 32>}, {pipeline_mode = #tpu.pipeline_mode<synchronous>, transform_indices = @transform_1, window_bounds = array<i64: 8, 32>}, {pipeline_mode = #tpu.pipeline_mode<synchronous>, transform_indices = @transform_2, window_bounds = array<i64: 1, 8>}, {pipeline_mode = #tpu.pipeline_mode<synchronous>, transform_indices = @transform_3, window_bounds = array<i64: 128, 8>}, {pipeline_mode = #tpu.pipeline_mode<synchronous>, transform_indices = @transform_4, window_bounds = array<i64: 1, 128>}, {transform_indices = @transform_5, window_bounds = array<i64: 2, 128>}]} {
    %c0 = arith.constant 0 : index
    %c0_0 = arith.constant 0 : index
    %c0_1 = arith.constant 0 : index
    %0 = vector.load %arg1[%c0, %c0_0, %c0_1] : memref<1x2x32xf32, #tpu.memory_space<vmem>>, vector<1x2x32xf32>
    %1 = vector.shape_cast %0 : vector<1x2x32xf32> to vector<2x32xf32>
    %c0_2 = arith.constant 0 : index
    %c0_3 = arith.constant 0 : index
    %2 = vector.load %arg2[%c0_2, %c0_3] : memref<8x32xf32, #tpu.memory_space<vmem>>, vector<8x32xf32>
    %cst = arith.constant dense<0.000000e+00> : vector<2x8xf32>
    %3 = tpu.matmul %1, %2, %cst {dimension_numbers = #tpu.dot_dimension_numbers<[1], [1], [0], [0], [0, 0, 1, 0], [], []>} : vector<2x32xf32>, vector<8x32xf32>, vector<2x8xf32> -> vector<2x8xf32>
    %c0_4 = arith.constant 0 : index
    %c0_5 = arith.constant 0 : index
    %4 = vector.load %arg3[%c0_4, %c0_5] : memref<1x8xf32, #tpu.memory_space<vmem>>, vector<1x8xf32>
    %5 = vector.broadcast %4 : vector<1x8xf32> to vector<2x8xf32>
    %6 = arith.addf %3, %5 : vector<2x8xf32>
    %cst_6 = arith.constant 0.000000e+00 : f32
    %7 = vector.broadcast %cst_6 : f32 to vector<2x8xf32>
    %8 = arith.maximumf %6, %7 : vector<2x8xf32>
    %c0_7 = arith.constant 0 : index
    %c0_8 = arith.constant 0 : index
    %9 = vector.load %arg4[%c0_7, %c0_8] : memref<128x8xf32, #tpu.memory_space<vmem>>, vector<128x8xf32>
    %cst_9 = arith.constant dense<0.000000e+00> : vector<2x128xf32>
    %10 = tpu.matmul %8, %9, %cst_9 {dimension_numbers = #tpu.dot_dimension_numbers<[1], [1], [0], [0], [0, 0, 1, 0], [], []>} : vector<2x8xf32>, vector<128x8xf32>, vector<2x128xf32> -> vector<2x128xf32>
    %c0_10 = arith.constant 0 : index
    %c0_11 = arith.constant 0 : index
    %11 = vector.load %arg5[%c0_10, %c0_11] : memref<1x128xf32, #tpu.memory_space<vmem>>, vector<1x128xf32>
    %12 = vector.broadcast %11 : vector<1x128xf32> to vector<2x128xf32>
    %13 = arith.addf %10, %12 : vector<2x128xf32>
    %cst_12 = arith.constant 3.000000e+00 : f32
    %14 = vector.broadcast %cst_12 : f32 to vector<2x128xf32>
    %15 = arith.addf %13, %14 : vector<2x128xf32>
    %cst_13 = arith.constant 0.000000e+00 : f32
    %cst_14 = arith.constant 6.000000e+00 : f32
    %16 = vector.broadcast %cst_13 : f32 to vector<2x128xf32>
    %17 = arith.maximumf %16, %15 : vector<2x128xf32>
    %18 = vector.broadcast %cst_14 : f32 to vector<2x128xf32>
    %19 = arith.minimumf %18, %17 : vector<2x128xf32>
    %cst_15 = arith.constant 0.166666672 : f32
    %20 = vector.broadcast %cst_15 : f32 to vector<2x128xf32>
    %21 = arith.mulf %19, %20 : vector<2x128xf32>
    %c0_16 = arith.constant 0 : index
    %c0_17 = arith.constant 0 : index
    %22 = vector.load %arg6[%c0_16, %c0_17] : memref<2x128xf32, #tpu.memory_space<vmem>>, vector<2x128xf32>
    tpu.vector_store %arg6[%c0_16, %c0_17], %21 {strides = array<i32>} : memref<2x128xf32, #tpu.memory_space<vmem>>, vector<2x128xf32>,
    return
  }
  func.func @transform_0(%arg0: i32) -> (i32, i32, i32) {
    %c0_i32 = arith.constant 0 : i32
    %c0_i32_0 = arith.constant 0 : i32
    %c0_i32_1 = arith.constant 0 : i32
    return %c0_i32, %arg0, %c0_i32_0 : i32, i32, i32
  }
  func.func @transform_1(%arg0: i32) -> (i32, i32) {
    %c0_i32 = arith.constant 0 : i32
    %c0_i32_0 = arith.constant 0 : i32
    %c0_i32_1 = arith.constant 0 : i32
    return %c0_i32, %c0_i32_0 : i32, i32
  }
  func.func @transform_2(%arg0: i32) -> (i32, i32) {
    %c0_i32 = arith.constant 0 : i32
    %c0_i32_0 = arith.constant 0 : i32
    %c0_i32_1 = arith.constant 0 : i32
    return %c0_i32, %c0_i32_0 : i32, i32
  }
  func.func @transform_3(%arg0: i32) -> (i32, i32) {
    %c0_i32 = arith.constant 0 : i32
    %c0_i32_0 = arith.constant 0 : i32
    %c0_i32_1 = arith.constant 0 : i32
    return %c0_i32, %c0_i32_0 : i32, i32
  }
  func.func @transform_4(%arg0: i32) -> (i32, i32) {
    %c0_i32 = arith.constant 0 : i32
    %c0_i32_0 = arith.constant 0 : i32
    %c0_i32_1 = arith.constant 0 : i32
    return %c0_i32, %c0_i32_0 : i32, i32
  }
  func.func @transform_5(%arg0: i32) -> (i32, i32) {
    %c0_i32 = arith.constant 0 : i32
    %c0_i32_0 = arith.constant 0 : i32
    return %arg0, %c0_i32 : i32, i32
  }
}

</mosaic_0001>

<llo_original>
// kernel: tpu_custom_call.1
$region0: #{tpu_custom_call.1}
  #allocation0 [shape = 'u32[]', space=smem, size = 0x4, offset = 0x4, fixed_abs, tag = 'smem constant byte address 0x4 - core index']
  #allocation1 [shape = 'u32[144,128]{1,0:T(1,128)}', space=vmem, size = 0x12000, scoped, tag = 'internal scratch']
  %s0 = inlined_call_operand.vmem [shape: f32[8,2,32], index: 0, kind: input, shape index: {}]
  %s1 = inlined_call_operand.vmem [shape: f32[8,32], index: 1, kind: input, shape index: {}]
  %s2 = inlined_call_operand.vmem [shape: f32[1,8], index: 2, kind: input, shape index: {}]
  %s3 = inlined_call_operand.vmem [shape: f32[128,8], index: 3, kind: input, shape index: {}]
  %s4 = inlined_call_operand.vmem [shape: f32[1,128], index: 4, kind: input, shape index: {}]
  %s5 = inlined_call_operand.hbm [shape: f32[2,128], index: 5, kind: output, shape index: {}]
  %s6 = sld [smem:[#allocation0]]
  $region30: #{tpu_custom_call.1} parent=0
    _
  %s8 = ssub.s32 1, %s6
  %s9 = scalar_select 0, %s8, %s6
  $region1: #{tpu_custom_call.1} parent=0
    #allocation2 [shape = 'u8[1024]{0}', space=vmem, size = 0x400, scoped, tag = 'output window, operand 0, single buffered']
    #allocation3 [shape = 's32[1]{0}', space=sflag, size = 0x4, scoped, tag = 'scoped memory for tpu_custom_call.1']
    %10 = vsyncpa [#allocation3], 0
    // Predicated region
    $region2: #{tpu_custom_call.1} parent=1 // pred_check
      _
    $region3: #{tpu_custom_call.1} parent=1 // pred_check_branch
      %12 = sbr.rel (0) target = $region5
    $region4: #{tpu_custom_call.1} parent=1 // pred_region
      _
    $region5: #{tpu_custom_call.1} parent=1 // pred_fallthru
      _
    // Predicated region
    $region6: #{tpu_custom_call.1} parent=1 // pred_check
      _
    $region7: #{tpu_custom_call.1} parent=1 // pred_check_branch
      %14 = sbr.rel (0) target = $region9
    $region8: #{tpu_custom_call.1} parent=1 // pred_region
      _
    $region9: #{tpu_custom_call.1} parent=1 // pred_fallthru
      _
    // Predicated region
    $region10: #{tpu_custom_call.1} parent=1 // pred_check
      _
    $region11: #{tpu_custom_call.1} parent=1 // pred_check_branch
      %16 = sbr.rel (0) target = $region13
    $region12: #{tpu_custom_call.1} parent=1 // pred_region
      _
    $region13: #{tpu_custom_call.1} parent=1 // pred_fallthru
      _
    // Predicated region
    $region14: #{tpu_custom_call.1} parent=1 // pred_check
      _
    $region15: #{tpu_custom_call.1} parent=1 // pred_check_branch
      %18 = sbr.rel (0) target = $region17
    $region16: #{tpu_custom_call.1} parent=1 // pred_region
      _
    $region17: #{tpu_custom_call.1} parent=1 // pred_fallthru
      _
    // Predicated region
    $region18: #{tpu_custom_call.1} parent=1 // pred_check
      _
    $region19: #{tpu_custom_call.1} parent=1 // pred_check_branch
      %20 = sbr.rel (0) target = $region21
    $region20: #{tpu_custom_call.1} parent=1 // pred_region
      _
    $region21: #{tpu_custom_call.1} parent=1 // pred_fallthru
      _
    %v21 = vld [vmem:[%s0] sm:$0x3]
    %v22 = vld [vmem:[%s1] sm:$0xff]
    %v23 = vld [vmem:[%s2] sm:$0x1]
    %v25 = vlaneseq
    %v26 = vshrl.u32 %v25, 7
    %v27 = vsub.s32 0, %v26
    %v28 = vrot.slane %v23, %v27
    %vm30 = vcmask 261120
    %v32 = vsel %vm30, %v21, 0
    %v35 = vsel %vm30, %v22, 0
    %37 = vmatprep.subr.mxu0 0.0
    %38 = vmatpush1.xpose.msra.mxu0 %v35
    %39 = vmatprep.subr.mxu0 0.0
    %40 = vmatpush1.xpose.msra.mxu0 0.0
    %41 = vmatprep.subr.mxu0 0.0
    %42 = vmatpush1.xpose.msra.mxu0 0.0
    %43 = vmatprep.subr.mxu0 0.0
    %44 = vmatpush1.xpose.msra.mxu0 0.0
    %45 = vmatprep.subr.mxu0 0.0
    %46 = vmatpush1.xpose.msra.mxu0 0.0
    %47 = vmatprep.subr.mxu0 0.0
    %48 = vmatpush1.xpose.msra.mxu0 0.0
    %49 = vmatprep.subr.mxu0 0.0
    %50 = vmatpush1.xpose.msra.mxu0 0.0
    %51 = vmatprep.subr.mxu0 0.0
    %52 = vmatpush1.xpose.msra.mxu0 0.0
    %53 = vmatprep.subr.mxu0 0.0
    %54 = vmatpush1.xpose.msra.mxu0 0.0
    %55 = vmatprep.subr.mxu0 0.0
    %56 = vmatpush1.xpose.msra.mxu0 0.0
    %57 = vmatprep.subr.mxu0 0.0
    %58 = vmatpush1.xpose.msra.mxu0 0.0
    %59 = vmatprep.subr.mxu0 0.0
    %60 = vmatpush1.xpose.msra.mxu0 0.0
    %61 = vmatprep.subr.mxu0 0.0
    %62 = vmatpush1.xpose.msra.mxu0 0.0
    %63 = vmatprep.subr.mxu0 0.0
    %64 = vmatpush1.xpose.msra.mxu0 0.0
    %65 = vmatprep.subr.mxu0 0.0
    %66 = vmatpush1.xpose.msra.mxu0 0.0
    %67 = vmatprep.subr.mxu0 0.0
    %68 = vmatpush1.xpose.msra.mxu0 0.0
    %69 = vmatprep.subr.mxu0 0.0
    %70 = vmatpush1.xpose.msra.mxu0 0.0
    %71 = vmatprep.subr.mxu0 0.0
    %72 = vmatpush1.xpose.msra.mxu0 0.0
    %73 = vmatprep.subr.mxu0 0.0
    %74 = vmatpush1.xpose.msra.mxu0 0.0
    %75 = vmatprep.subr.mxu0 0.0
    %76 = vmatpush1.xpose.msra.mxu0 0.0
    %77 = vmatprep.subr.mxu0 0.0
    %78 = vmatpush1.xpose.msra.mxu0 0.0
    %79 = vmatprep.subr.mxu0 0.0
    %80 = vmatpush1.xpose.msra.mxu0 0.0
    %81 = vmatprep.subr.mxu0 0.0
    %82 = vmatpush1.xpose.msra.mxu0 0.0
    %83 = vmatprep.subr.mxu0 0.0
    %84 = vmatpush1.xpose.msra.mxu0 0.0
    %85 = vmatprep.subr.mxu0 0.0
    %86 = vmatpush1.xpose.msra.mxu0 0.0
    %87 = vmatprep.subr.mxu0 0.0
    %88 = vmatpush1.xpose.msra.mxu0 0.0
    %89 = vmatprep.subr.mxu0 0.0
    %90 = vmatpush1.xpose.msra.mxu0 0.0
    %91 = vmatprep.subr.mxu0 0.0
    %92 = vmatpush1.xpose.msra.mxu0 0.0
    %93 = vmatprep.subr.mxu0 0.0
    %94 = vmatpush1.xpose.msra.mxu0 0.0
    %95 = vmatprep.subr.mxu0 0.0
    %96 = vmatpush1.xpose.msra.mxu0 0.0
    %97 = vmatprep.subr.mxu0 0.0
    %98 = vmatpush1.xpose.msra.mxu0 0.0
    %99 = vmatprep.subr.mxu0 0.0
    %100 = vmatpush1.xpose.msra.mxu0 0.0
    %101 = vmatprep.mubr.f32.mxu0 0.0
    %102 = vmatmul.mubr.f32.gmra.mrb[0].mxu0 %v32
    %v103 = vpop.f32.mrb[0].mxu0
    %v104 = vadd.f32 %v28, %v103
    %v105 = vpop.f32.mrb[0].mxu0
    %106 = vdwg.mxu0
    %v107 = vmax.f32 %v104, 0.0
    %v108 = vld [vmem:[%s3] sm:$0xff]
    %v109 = vld [vmem:[%s3 + $0x8] sm:$0xff]
    %v110 = vld [vmem:[%s3 + $0x10] sm:$0xff]
    %v111 = vld [vmem:[%s3 + $0x18] sm:$0xff]
    %v112 = vld [vmem:[%s3 + $0x20] sm:$0xff]
    %v113 = vld [vmem:[%s3 + $0x28] sm:$0xff]
    %v114 = vld [vmem:[%s3 + $0x30] sm:$0xff]
    %v115 = vld [vmem:[%s3 + $0x38] sm:$0xff]
    %v116 = vld [vmem:[%s3 + $0x40] sm:$0xff]
    %v117 = vld [vmem:[%s3 + $0x48] sm:$0xff]
    %v118 = vld [vmem:[%s3 + $0x50] sm:$0xff]
    %v119 = vld [vmem:[%s3 + $0x58] sm:$0xff]
    %v120 = vld [vmem:[%s3 + $0x60] sm:$0xff]
    %v121 = vld [vmem:[%s3 + $0x68] sm:$0xff]
    %v122 = vld [vmem:[%s3 + $0x70] sm:$0xff]
    %v123 = vld [vmem:[%s3 + $0x78] sm:$0xff]
    %v124 = vld [vmem:[%s4] sm:$0x1]
    %v126 = vlaneseq
    %v127 = vshrl.u32 %v126, 7
    %v128 = vsub.s32 0, %v127
    %v129 = vrot.slane %v124, %v128
    %vm131 = vcmask 64512
    %v133 = vsel %vm131, %v107, 0
    %v136 = vsel %vm131, %v108, 0
    %v139 = vsel %vm131, %v109, 0
    %v142 = vsel %vm131, %v110, 0
    %v145 = vsel %vm131, %v111, 0
    %v148 = vsel %vm131, %v112, 0
    %v151 = vsel %vm131, %v113, 0
    %v154 = vsel %vm131, %v114, 0
    %v157 = vsel %vm131, %v115, 0
    %v160 = vsel %vm131, %v116, 0
    %v163 = vsel %vm131, %v117, 0
    %v166 = vsel %vm131, %v118, 0
    %v169 = vsel %vm131, %v119, 0
    %v172 = vsel %vm131, %v120, 0
    %v175 = vsel %vm131, %v121, 0
    %v178 = vsel %vm131, %v122, 0
    %v181 = vsel %vm131, %v123, 0
    %183 = vmatprep.subr.mxu0 0.0
    %184 = vmatpush1.xpose.msra.mxu0 %v136
    %185 = vmatprep.subr.mxu0 0.0
    %186 = vmatpush1.xpose.msra.mxu0 %v139
    %187 = vmatprep.subr.mxu0 0.0
    %188 = vmatpush1.xpose.msra.mxu0 %v142
    %189 = vmatprep.subr.mxu0 0.0
    %190 = vmatpush1.xpose.msra.mxu0 %v145
    %191 = vmatprep.subr.mxu0 0.0
    %192 = vmatpush1.xpose.msra.mxu0 %v148
    %193 = vmatprep.subr.mxu0 0.0
    %194 = vmatpush1.xpose.msra.mxu0 %v151
    %195 = vmatprep.subr.mxu0 0.0
    %196 = vmatpush1.xpose.msra.mxu0 %v154
    %197 = vmatprep.subr.mxu0 0.0
    %198 = vmatpush1.xpose.msra.mxu0 %v157
    %199 = vmatprep.subr.mxu0 0.0
    %200 = vmatpush1.xpose.msra.mxu0 %v160
    %201 = vmatprep.subr.mxu0 0.0
    %202 = vmatpush1.xpose.msra.mxu0 %v163
    %203 = vmatprep.subr.mxu0 0.0
    %204 = vmatpush1.xpose.msra.mxu0 %v166
    %205 = vmatprep.subr.mxu0 0.0
    %206 = vmatpush1.xpose.msra.mxu0 %v169
    %207 = vmatprep.subr.mxu0 0.0
    %208 = vmatpush1.xpose.msra.mxu0 %v172
    %209 = vmatprep.subr.mxu0 0.0
    %210 = vmatpush1.xpose.msra.mxu0 %v175
    %211 = vmatprep.subr.mxu0 0.0
    %212 = vmatpush1.xpose.msra.mxu0 %v178
    %213 = vmatprep.subr.mxu0 0.0
    %214 = vmatpush1.xpose.msra.mxu0 %v181
    %215 = vmatprep.subr.mxu0 0.0
    %216 = vmatpush1.xpose.msra.mxu0 0.0
    %217 = vmatprep.subr.mxu0 0.0
    %218 = vmatpush1.xpose.msra.mxu0 0.0
    %219 = vmatprep.subr.mxu0 0.0
    %220 = vmatpush1.xpose.msra.mxu0 0.0
    %221 = vmatprep.subr.mxu0 0.0
    %222 = vmatpush1.xpose.msra.mxu0 0.0
    %223 = vmatprep.subr.mxu0 0.0
    %224 = vmatpush1.xpose.msra.mxu0 0.0
    %225 = vmatprep.subr.mxu0 0.0
    %226 = vmatpush1.xpose.msra.mxu0 0.0
    %227 = vmatprep.subr.mxu0 0.0
    %228 = vmatpush1.xpose.msra.mxu0 0.0
    %229 = vmatprep.subr.mxu0 0.0
    %230 = vmatpush1.xpose.msra.mxu0 0.0
    %231 = vmatprep.subr.mxu0 0.0
    %232 = vmatpush1.xpose.msra.mxu0 0.0
    %233 = vmatprep.subr.mxu0 0.0
    %234 = vmatpush1.xpose.msra.mxu0 0.0
    %235 = vmatprep.subr.mxu0 0.0
    %236 = vmatpush1.xpose.msra.mxu0 0.0
    %237 = vmatprep.subr.mxu0 0.0
    %238 = vmatpush1.xpose.msra.mxu0 0.0
    %239 = vmatprep.subr.mxu0 0.0
    %240 = vmatpush1.xpose.msra.mxu0 0.0
    %241 = vmatprep.subr.mxu0 0.0
    %242 = vmatpush1.xpose.msra.mxu0 0.0
    %243 = vmatprep.subr.mxu0 0.0
    %244 = vmatpush1.xpose.msra.mxu0 0.0
    %245 = vmatprep.subr.mxu0 0.0
    %246 = vmatpush1.xpose.msra.mxu0 0.0
    %247 = vmatprep.mubr.f32.mxu0 0.0
    %248 = vmatmul.mubr.f32.gmra.mrb[0].mxu0 %v133
    %v249 = vpop.f32.mrb[0].mxu0
    %v250 = vadd.f32 %v129, %v249
    %v251 = vpop.f32.mrb[0].mxu0
    %252 = vdwg.mxu0
    %v253 = vadd.f32 %v250, 3.0
    %v254 = vmax.f32 %v253, 0.0
    %v255 = vmin.f32 %v254, 6.0
    %v256 = vmul.f32 %v255, 0.16666667
    %257 = vst [vmem:[#allocation2] sm:$0x3] %v256
    // Predicated region
    $region22: #{tpu_custom_call.1} parent=1 // pred_check
      _
    $region23: #{tpu_custom_call.1} parent=1 // pred_check_branch
      %259 = sbr.rel (0) target = $region25
    $region24: #{tpu_custom_call.1} parent=1 // pred_region
      %s261 = ssub.s32 32, 32
      %262 = vsyncadd [#allocation3], %s261
      %s264 = sshll.u32 [#allocation2], 4
      %s265 = int_to_ptr.vmem [resolvable:$true] %s264
      %267 = dma.vmem_to_hbm [thread:$0]  %s265, 32, %s5, [#allocation3]
    $region25: #{tpu_custom_call.1} parent=1 // pred_fallthru
      _
    // Predicated region
    $region26: #{tpu_custom_call.1} parent=1 // pred_check
      _
    $region27: #{tpu_custom_call.1} parent=1 // pred_check_branch
      %269 = sbr.rel (0) target = $region29
    $region28: #{tpu_custom_call.1} parent=1 // pred_region
      %270 = dma.done [#allocation3], 32
    $region29: #{tpu_custom_call.1} parent=1 // pred_fallthru
      _
    %271 = vsyncpa [#allocation3], 1

</llo_original>
